<compile_context>
chip_gen: v7x
topology: tpu7x:2x2x1
jax: 0.10.0
libtpu: 0.0.40
codegen_flags: <defaults>
</compile_context>

<pallas_src>
import functools
from math import sqrt

import jax
import jax.numpy as jnp
from jax import lax
from jax.experimental import pallas as pl
from jax.experimental.pallas import tpu as pltpu


def _has_bf16_eup():
    """v5e (v5 lite) has no bf16 EUP/VPU path; v6e / v7x do."""
    try:
        kind = jax.devices()[0].device_kind.lower()
    except Exception:
        return True
    return not any(t in kind for t in ("v5 lite", "v5e", "v5litepod"))


def _flash_sdpa_kernel(q_ref, k_ref, v_ref, o_ref,
                       qs_sc, m_sc, l_sc, acc_sc, *,
                       inv_temp, mm_dtype, num_dtype, seq_len, need_mask):
    """One (batch, q_tile, kv_tile) grid step of online-softmax attention."""
    kv = pl.program_id(2)

    # Init accumulators at the first kv step for this (batch, q_tile).
    @pl.when(kv == 0)
    def _():
        # Hoist the temperature scale out of the kv loop: the q block is
        # resident across the kv axis, scale it once (in f32 for accuracy).
        qs_sc[...] = (q_ref[0].astype(jnp.float32) * inv_temp).astype(mm_dtype)
        m_sc[...] = jnp.full(m_sc.shape, -jnp.inf, dtype=m_sc.dtype)
        l_sc[...] = jnp.zeros(l_sc.shape, dtype=l_sc.dtype)
        acc_sc[...] = jnp.zeros(acc_sc.shape, dtype=acc_sc.dtype)

    q = qs_sc[...]                       # (tq, D), mm_dtype, already / T
    k = k_ref[0]                         # (tk, D)
    v = v_ref[0]                         # (tk, D)
    if k.dtype != mm_dtype:
        k = k.astype(mm_dtype)
    if v.dtype != mm_dtype:
        v = v.astype(mm_dtype)

    # scores = (q / T) @ k^T without an explicit transpose: contract the last
    # dim of both operands, f32 accumulation on the MXU.
    s = lax.dot_general(
        q, k,
        dimension_numbers=(((1,), (1,)), ((), ())),
        preferred_element_type=jnp.float32,
    )                                    # (tq, tk), f32

    if need_mask:
        # Padded (out-of-range) keys get a huge negative score -> exp -> 0.
        key_idx = kv * s.shape[-1] + lax.broadcasted_iota(jnp.int32, s.shape, 1)
        s = jnp.where(key_idx < seq_len, s, jnp.float32(-1e30))

    # Online softmax update (stats m, l and accumulator stay in f32).
    m_prev = m_sc[...]
    m_new = jnp.maximum(m_prev, jnp.max(s, axis=-1, keepdims=True))
    alpha = jnp.exp(m_prev - m_new)                              # (tq, 1) f32
    # Softmax numerator in num_dtype (bf16 on v6e/v7x with bf16 inputs:
    # ~2x EUP throughput and no VPU cast before the p @ v matmul).
    p = jnp.exp((s - m_new).astype(num_dtype))                   # (tq, tk)
    l_sc[...] = alpha * l_sc[...] + jnp.sum(
        p, axis=-1, keepdims=True, dtype=jnp.float32)
    acc_sc[...] = alpha * acc_sc[...] + jnp.dot(
        p.astype(mm_dtype), v, preferred_element_type=jnp.float32)
    m_sc[...] = m_new

    # Finalize at the last kv step: normalize and write the output tile.
    @pl.when(kv == pl.num_programs(2) - 1)
    def _():
        l = l_sc[...]
        inv = pl.reciprocal(l, approx=True)    # EUP slot, essentially free
        inv = inv * (2.0 - l * inv)            # one Newton step -> ~exact
        o_ref[0] = (acc_sc[...] * inv).astype(o_ref.dtype)


def _choose_tiles(S, B):
    """Asymmetric flash tiles: tq <= 256, tk <= 512. Falls back to padding
    (never to a full-extent O(S^2) tile) when S has no friendly divisor."""
    if S < 128:
        tk = -(-S // 8) * 8                    # single sublane-aligned tile
        tq = tk
    else:
        for cand in (512, 256, 128):           # exact divisors, largest first
            if S % cand == 0:
                tk = cand
                break
        else:
            tk = 256                           # pad S up to a 256 multiple
        tq = min(tk, 256)
    s_pad = -(-S // tk) * tk
    # v7x has 2 TensorCores: keep the "parallel" extent >= 2 when possible so
    # neither core sits idle.
    while B * (s_pad // tq) < 2 and tq >= 16:
        tq //= 2
    return tq, tk


def scaled_dot_product_attention(v, k, q, temperature, *,
                                 tq=None, tk=None,
                                 matmul_dtype=None,
                                 softmax_numerator_dtype=None,
                                 kv_buffer_count=2):
    """Pallas equivalent of ScaledDotProductAttention.forward(v, k, q).

    matmul_dtype: override MXU operand dtype (e.g. jnp.bfloat16 on v5e when
        inputs arrive as f32); accumulation stays f32.
    softmax_numerator_dtype: override exp/p dtype; defaults to bf16 only when
        inputs are bf16 and the chip has a bf16 EUP (v6e/v7x), else f32.
    kv_buffer_count: >2 adds pl.Buffered(n) on the streamed K/V specs if
        profiling shows the kv-axis DMA exposed.
    """
    B, S, D = q.shape
    assert k.shape == (B, S, D) and v.shape == (B, S, D)

    if tq is None or tk is None:
        auto_tq, auto_tk = _choose_tiles(S, B)
        tq = auto_tq if tq is None else tq
        tk = auto_tk if tk is None else tk

    s_pad = -(-S // tk) * tk                   # pad S up to a tk multiple
    assert s_pad % tq == 0, "tq must divide the padded sequence length"

    mm_dtype = q.dtype if matmul_dtype is None else jnp.dtype(matmul_dtype)
    if softmax_numerator_dtype is not None:
        num_dtype = jnp.dtype(softmax_numerator_dtype)
    elif q.dtype == jnp.dtype(jnp.bfloat16) and _has_bf16_eup():
        num_dtype = jnp.dtype(jnp.bfloat16)    # v6e / v7x bf16 exp path
    else:
        num_dtype = jnp.dtype(jnp.float32)     # v5e or f32 inputs

    if s_pad != S:
        pad_cfg = ((0, 0), (0, s_pad - S), (0, 0))
        q = jnp.pad(q, pad_cfg)
        k = jnp.pad(k, pad_cfg)
        v = jnp.pad(v, pad_cfg)

    grid = (B, s_pad // tq, s_pad // tk)
    inv_temp = 1.0 / float(temperature)

    kernel = functools.partial(
        _flash_sdpa_kernel,
        inv_temp=inv_temp,
        mm_dtype=mm_dtype,
        num_dtype=num_dtype,
        seq_len=S,
        need_mask=(s_pad != S),
    )

    q_spec = pl.BlockSpec((1, tq, D), lambda b, i, j: (b, i, 0))
    o_spec = pl.BlockSpec((1, tq, D), lambda b, i, j: (b, i, 0))
    if kv_buffer_count == 2:
        kv_spec = pl.BlockSpec((1, tk, D), lambda b, i, j: (b, j, 0))
    else:
        kv_spec = pl.BlockSpec((1, tk, D), lambda b, i, j: (b, j, 0),
                               pipeline_mode=pl.Buffered(kv_buffer_count))

    out = pl.pallas_call(
        kernel,
        out_shape=jax.ShapeDtypeStruct((B, s_pad, D), q.dtype),
        grid_spec=pltpu.PrefetchScalarGridSpec(
            num_scalar_prefetch=0,
            grid=grid,
            in_specs=[q_spec, kv_spec, kv_spec],
            out_specs=o_spec,
            scratch_shapes=[
                pltpu.VMEM((tq, D), mm_dtype),      # (q / T), cached per q tile
                pltpu.VMEM((tq, 1), jnp.float32),   # running max m
                pltpu.VMEM((tq, 1), jnp.float32),   # running denom l
                pltpu.VMEM((tq, D), jnp.float32),   # output accumulator
            ],
        ),
        compiler_params=pltpu.CompilerParams(
            dimension_semantics=("parallel", "parallel", "arbitrary"),
        ),
    )(q, k, v)

    return out[:, :S, :] if s_pad != S else out


def _reference(v, k, q, temperature):
    scores = jnp.matmul(q / temperature, jnp.swapaxes(k, -2, -1))
    attn = jax.nn.softmax(scores, axis=-1)
    return jnp.matmul(attn, v)


if __name__ == "__main__":
    # Case 1: shapes consistent with the module's expected use (B, S, D).
    B, S, D = 2, 8, 32
    temperature = sqrt(D)

    key = jax.random.PRNGKey(0)
    kq, kk, kv_ = jax.random.split(key, 3)
    q = jax.random.normal(kq, (B, S, D), dtype=jnp.float32)
    k = jax.random.normal(kk, (B, S, D), dtype=jnp.float32)
    v = jax.random.normal(kv_, (B, S, D), dtype=jnp.float32)

    out = jax.block_until_ready(scaled_dot_product_attention(v, k, q, temperature))
    ref = _reference(v, k, q, temperature)
    assert out.shape == (B, S, D)
    assert jnp.allclose(out, ref, atol=1e-4, rtol=1e-4), "mismatch vs reference"

    # Case 2: non-divisible sequence length exercises the padded / masked-key
    # path (no full-extent tile fallback any more).
    B2, S2, D2 = 1, 12, 32
    q2 = jax.random.normal(jax.random.PRNGKey(1), (B2, S2, D2), dtype=jnp.float32)
    k2 = jax.random.normal(jax.random.PRNGKey(2), (B2, S2, D2), dtype=jnp.float32)
    v2 = jax.random.normal(jax.random.PRNGKey(3), (B2, S2, D2), dtype=jnp.float32)
    out2 = jax.block_until_ready(
        scaled_dot_product_attention(v2, k2, q2, sqrt(D2)))
    ref2 = _reference(v2, k2, q2, sqrt(D2))
    assert out2.shape == (B2, S2, D2)
    assert jnp.allclose(out2, ref2, atol=1e-4, rtol=1e-4), "mismatch (padded path)"

    print("KERNEL_OK")
</pallas_src>

<mosaic_0001>
module attributes {stable_mosaic.version = 11 : i64} {
  func.func @_flash_sdpa_kernel(%arg0: i32, %arg1: i32, %arg2: i32, %arg3: memref<1x8x32xf32, #tpu.memory_space<vmem>>, %arg4: memref<1x8x32xf32, #tpu.memory_space<vmem>>, %arg5: memref<1x8x32xf32, #tpu.memory_space<vmem>>, %arg6: memref<1x8x32xf32, #tpu.memory_space<vmem>>, %arg7: memref<8x32xf32, #tpu.memory_space<vmem>>, %arg8: memref<8x1xf32, #tpu.memory_space<vmem>>, %arg9: memref<8x1xf32, #tpu.memory_space<vmem>>, %arg10: memref<8x32xf32, #tpu.memory_space<vmem>>) attributes {dimension_semantics = [#tpu.dimension_semantics<parallel>, #tpu.dimension_semantics<parallel>, #tpu.dimension_semantics<arbitrary>], iteration_bounds = array<i64: 2, 1, 1>, scalar_prefetch = 0 : i64, scratch_operands = 4 : i64, tpu.core_type = #tpu.core_type<tc>, window_params = [{transform_indices = @transform_0, window_bounds = array<i64: 1, 8, 32>}, {transform_indices = @transform_1, window_bounds = array<i64: 1, 8, 32>}, {transform_indices = @transform_2, window_bounds = array<i64: 1, 8, 32>}, {transform_indices = @transform_3, window_bounds = array<i64: 1, 8, 32>}]} {
    %c0_i32 = arith.constant 0 : i32
    %0 = arith.cmpi eq, %arg2, %c0_i32 : i32
    %1 = arith.extui %0 : i1 to i32
    %c0_i32_0 = arith.constant 0 : i32
    %2 = arith.cmpi ne, %1, %c0_i32_0 : i32
    scf.if %2 {
      %c0_25 = arith.constant 0 : index
      %c0_26 = arith.constant 0 : index
      %c0_27 = arith.constant 0 : index
      %34 = vector.load %arg3[%c0_25, %c0_26, %c0_27] : memref<1x8x32xf32, #tpu.memory_space<vmem>>, vector<1x8x32xf32>
      %35 = vector.shape_cast %34 : vector<1x8x32xf32> to vector<8x32xf32>
      %cst_28 = arith.constant 0.176776692 : f32
      %36 = vector.broadcast %cst_28 : f32 to vector<8x32xf32>
      %37 = arith.mulf %35, %36 : vector<8x32xf32>
      %c0_29 = arith.constant 0 : index
      %c0_30 = arith.constant 0 : index
      %38 = vector.load %arg7[%c0_29, %c0_30] : memref<8x32xf32, #tpu.memory_space<vmem>>, vector<8x32xf32>
      tpu.vector_store %arg7[%c0_29, %c0_30], %37 {strides = array<i32>} : memref<8x32xf32, #tpu.memory_space<vmem>>, vector<8x32xf32>,
      %cst_31 = arith.constant 0xFF800000 : f32
      %39 = vector.broadcast %cst_31 : f32 to vector<8x1xf32>
      %c0_32 = arith.constant 0 : index
      %c0_33 = arith.constant 0 : index
      %40 = vector.load %arg8[%c0_32, %c0_33] : memref<8x1xf32, #tpu.memory_space<vmem>>, vector<8x1xf32>
      tpu.vector_store %arg8[%c0_32, %c0_33], %39 {strides = array<i32>} : memref<8x1xf32, #tpu.memory_space<vmem>>, vector<8x1xf32>,
      %cst_34 = arith.constant 0.000000e+00 : f32
      %41 = vector.broadcast %cst_34 : f32 to vector<8x1xf32>
      %c0_35 = arith.constant 0 : index
      %c0_36 = arith.constant 0 : index
      %42 = vector.load %arg9[%c0_35, %c0_36] : memref<8x1xf32, #tpu.memory_space<vmem>>, vector<8x1xf32>
      tpu.vector_store %arg9[%c0_35, %c0_36], %41 {strides = array<i32>} : memref<8x1xf32, #tpu.memory_space<vmem>>, vector<8x1xf32>,
      %cst_37 = arith.constant 0.000000e+00 : f32
      %43 = vector.broadcast %cst_37 : f32 to vector<8x32xf32>
      %c0_38 = arith.constant 0 : index
      %c0_39 = arith.constant 0 : index
      %44 = vector.load %arg10[%c0_38, %c0_39] : memref<8x32xf32, #tpu.memory_space<vmem>>, vector<8x32xf32>
      tpu.vector_store %arg10[%c0_38, %c0_39], %43 {strides = array<i32>} : memref<8x32xf32, #tpu.memory_space<vmem>>, vector<8x32xf32>,
    } else {
    }
    %c0 = arith.constant 0 : index
    %c0_1 = arith.constant 0 : index
    %3 = vector.load %arg7[%c0, %c0_1] : memref<8x32xf32, #tpu.memory_space<vmem>>, vector<8x32xf32>
    %c0_2 = arith.constant 0 : index
    %c0_3 = arith.constant 0 : index
    %c0_4 = arith.constant 0 : index
    %4 = vector.load %arg4[%c0_2, %c0_3, %c0_4] : memref<1x8x32xf32, #tpu.memory_space<vmem>>, vector<1x8x32xf32>
    %5 = vector.shape_cast %4 : vector<1x8x32xf32> to vector<8x32xf32>
    %c0_5 = arith.constant 0 : index
    %c0_6 = arith.constant 0 : index
    %c0_7 = arith.constant 0 : index
    %6 = vector.load %arg5[%c0_5, %c0_6, %c0_7] : memref<1x8x32xf32, #tpu.memory_space<vmem>>, vector<1x8x32xf32>
    %7 = vector.shape_cast %6 : vector<1x8x32xf32> to vector<8x32xf32>
    %cst = arith.constant dense<0.000000e+00> : vector<8x8xf32>
    %8 = tpu.matmul %3, %5, %cst {dimension_numbers = #tpu.dot_dimension_numbers<[1], [1], [0], [0], [0, 0, 1, 0], [], []>} : vector<8x32xf32>, vector<8x32xf32>, vector<8x8xf32> -> vector<8x8xf32>
    %c0_8 = arith.constant 0 : index
    %c0_9 = arith.constant 0 : index
    %9 = vector.load %arg8[%c0_8, %c0_9] : memref<8x1xf32, #tpu.memory_space<vmem>>, vector<8x1xf32>
    %cst_10 = arith.constant dense<0xFF800000> : vector<8xf32>
    %10 = vector.multi_reduction <maximumf>, %8, %cst_10 [1] : vector<8x8xf32> to vector<8xf32>
    %11 = vector.shape_cast %10 : vector<8xf32> to vector<8x1xf32>
    %12 = arith.maximumf %9, %11 : vector<8x1xf32>
    %13 = arith.subf %9, %12 : vector<8x1xf32>
    %14 = math.exp %13 : vector<8x1xf32>
    %15 = vector.broadcast %12 : vector<8x1xf32> to vector<8x8xf32>
    %16 = arith.subf %8, %15 : vector<8x8xf32>
    %17 = math.exp %16 : vector<8x8xf32>
    %c0_11 = arith.constant 0 : index
    %c0_12 = arith.constant 0 : index
    %18 = vector.load %arg9[%c0_11, %c0_12] : memref<8x1xf32, #tpu.memory_space<vmem>>, vector<8x1xf32>
    %19 = arith.mulf %14, %18 : vector<8x1xf32>
    %cst_13 = arith.constant dense<0.000000e+00> : vector<8xf32>
    %20 = vector.multi_reduction <add>, %17, %cst_13 [1] : vector<8x8xf32> to vector<8xf32>
    %21 = vector.shape_cast %20 : vector<8xf32> to vector<8x1xf32>
    %22 = arith.addf %19, %21 : vector<8x1xf32>
    %c0_14 = arith.constant 0 : index
    %c0_15 = arith.constant 0 : index
    %23 = vector.load %arg9[%c0_14, %c0_15] : memref<8x1xf32, #tpu.memory_space<vmem>>, vector<8x1xf32>
    tpu.vector_store %arg9[%c0_14, %c0_15], %22 {strides = array<i32>} : memref<8x1xf32, #tpu.memory_space<vmem>>, vector<8x1xf32>,
    %c0_16 = arith.constant 0 : index
    %c0_17 = arith.constant 0 : index
    %24 = vector.load %arg10[%c0_16, %c0_17] : memref<8x32xf32, #tpu.memory_space<vmem>>, vector<8x32xf32>
    %25 = vector.broadcast %14 : vector<8x1xf32> to vector<8x32xf32>
    %26 = arith.mulf %25, %24 : vector<8x32xf32>
    %cst_18 = arith.constant dense<0.000000e+00> : vector<8x32xf32>
    %27 = tpu.matmul %17, %7, %cst_18 {dimension_numbers = #tpu.dot_dimension_numbers<[1], [0], [0], [1], [0, 0, 1, 1], [], []>} : vector<8x8xf32>, vector<8x32xf32>, vector<8x32xf32> -> vector<8x32xf32>
    %28 = arith.addf %26, %27 : vector<8x32xf32>
    %c0_19 = arith.constant 0 : index
    %c0_20 = arith.constant 0 : index
    %29 = vector.load %arg10[%c0_19, %c0_20] : memref<8x32xf32, #tpu.memory_space<vmem>>, vector<8x32xf32>
    tpu.vector_store %arg10[%c0_19, %c0_20], %28 {strides = array<i32>} : memref<8x32xf32, #tpu.memory_space<vmem>>, vector<8x32xf32>,
    %c0_21 = arith.constant 0 : index
    %c0_22 = arith.constant 0 : index
    %30 = vector.load %arg8[%c0_21, %c0_22] : memref<8x1xf32, #tpu.memory_space<vmem>>, vector<8x1xf32>
    tpu.vector_store %arg8[%c0_21, %c0_22], %12 {strides = array<i32>} : memref<8x1xf32, #tpu.memory_space<vmem>>, vector<8x1xf32>,
    %c0_i32_23 = arith.constant 0 : i32
    %31 = arith.cmpi eq, %arg2, %c0_i32_23 : i32
    %32 = arith.extui %31 : i1 to i32
    %c0_i32_24 = arith.constant 0 : i32
    %33 = arith.cmpi ne, %32, %c0_i32_24 : i32
    scf.if %33 {
      %c0_25 = arith.constant 0 : index
      %c0_26 = arith.constant 0 : index
      %34 = vector.load %arg9[%c0_25, %c0_26] : memref<8x1xf32, #tpu.memory_space<vmem>>, vector<8x1xf32>
      %35 = tpu.reciprocal %34 {approx = true} : vector<8x1xf32> -> vector<8x1xf32>
      %36 = arith.mulf %34, %35 : vector<8x1xf32>
      %cst_27 = arith.constant 2.000000e+00 : f32
      %37 = vector.broadcast %cst_27 : f32 to vector<8x1xf32>
      %38 = arith.subf %37, %36 : vector<8x1xf32>
      %39 = arith.mulf %35, %38 : vector<8x1xf32>
      %c0_28 = arith.constant 0 : index
      %c0_29 = arith.constant 0 : index
      %40 = vector.load %arg10[%c0_28, %c0_29] : memref<8x32xf32, #tpu.memory_space<vmem>>, vector<8x32xf32>
      %41 = vector.broadcast %39 : vector<8x1xf32> to vector<8x32xf32>
      %42 = arith.mulf %40, %41 : vector<8x32xf32>
      %c0_30 = arith.constant 0 : index
      %c0_31 = arith.constant 0 : index
      %c0_32 = arith.constant 0 : index
      %43 = vector.load %arg6[%c0_30, %c0_31, %c0_32] : memref<1x8x32xf32, #tpu.memory_space<vmem>>, vector<1x8x32xf32>
      %44 = vector.shape_cast %43 : vector<1x8x32xf32> to vector<8x32xf32>
      %45 = vector.shape_cast %42 : vector<8x32xf32> to vector<1x8x32xf32>
      tpu.vector_store %arg6[%c0_30, %c0_31, %c0_32], %45 {strides = array<i32>} : memref<1x8x32xf32, #tpu.memory_space<vmem>>, vector<1x8x32xf32>,
    } else {
    }
    return
  }
  func.func @transform_0(%arg0: i32, %arg1: i32, %arg2: i32) -> (i32, i32, i32) {
    %c0_i32 = arith.constant 0 : i32
    %c0_i32_0 = arith.constant 0 : i32
    return %arg0, %arg1, %c0_i32 : i32, i32, i32
  }
  func.func @transform_1(%arg0: i32, %arg1: i32, %arg2: i32) -> (i32, i32, i32) {
    %c0_i32 = arith.constant 0 : i32
    %c0_i32_0 = arith.constant 0 : i32
    return %arg0, %arg2, %c0_i32 : i32, i32, i32
  }
  func.func @transform_2(%arg0: i32, %arg1: i32, %arg2: i32) -> (i32, i32, i32) {
    %c0_i32 = arith.constant 0 : i32
    %c0_i32_0 = arith.constant 0 : i32
    return %arg0, %arg2, %c0_i32 : i32, i32, i32
  }
  func.func @transform_3(%arg0: i32, %arg1: i32, %arg2: i32) -> (i32, i32, i32) {
    %c0_i32 = arith.constant 0 : i32
    %c0_i32_0 = arith.constant 0 : i32
    return %arg0, %arg1, %c0_i32 : i32, i32, i32
  }
}

</mosaic_0001>

<llo_original>
// kernel: tpu_custom_call.1
$region0: #{tpu_custom_call.1}
  #allocation0 [shape = 'u32[]', space=smem, size = 0x4, offset = 0x4, fixed_abs, tag = 'smem constant byte address 0x4 - core index']
  #allocation1 [shape = 'u32[144,128]{1,0:T(1,128)}', space=vmem, size = 0x12000, scoped, tag = 'internal scratch']
  #allocation2 [shape = 'f32[8,32]{1,0:T(8,128)}', space=vmem, size = 0x1000, scoped, tag = 'scratch operand']
  #allocation3 [shape = 'f32[8,1]{1,0:T(8,128)}', space=vmem, size = 0x1000, scoped, tag = 'scratch operand']
  #allocation4 [shape = 'f32[8,1]{1,0:T(8,128)}', space=vmem, size = 0x1000, scoped, tag = 'scratch operand']
  #allocation5 [shape = 'f32[8,32]{1,0:T(8,128)}', space=vmem, size = 0x1000, scoped, tag = 'scratch operand']
  %s0 = inlined_call_operand.hbm [shape: f32[2,8,32], index: 0, kind: input, shape index: {}]
  %s1 = inlined_call_operand.hbm [shape: f32[2,8,32], index: 1, kind: input, shape index: {}]
  %s2 = inlined_call_operand.hbm [shape: f32[2,8,32], index: 2, kind: input, shape index: {}]
  %s3 = inlined_call_operand.hbm [shape: f32[2,8,32], index: 3, kind: output, shape index: {}]
  %s4 = sld [smem:[#allocation0]]
  $region65: #{tpu_custom_call.1} parent=0
    _
  %s6 = ssub.s32 1, %s4
  %s7 = scalar_select 0, %s6, %s4
  $region1: #{tpu_custom_call.1} parent=0
    #allocation6 [shape = 'u8[8192]{0}', space=vmem, size = 0x2000, scoped, tag = 'input window, operand 0']
    #allocation7 [shape = 's32[2]{0}', space=sflag, size = 0x8, scoped, tag = 'scoped memory for tpu_custom_call.1']
    #allocation8 [shape = 's32[2]{0}', space=sflag, size = 0x8, scoped, tag = 'scoped memory for tpu_custom_call.1']
    #allocation9 [shape = 'u8[8192]{0}', space=vmem, size = 0x2000, scoped, tag = 'input window, operand 1']
    #allocation10 [shape = 's32[2]{0}', space=sflag, size = 0x8, scoped, tag = 'scoped memory for tpu_custom_call.1']
    #allocation11 [shape = 'u8[8192]{0}', space=vmem, size = 0x2000, scoped, tag = 'input window, operand 2']
    #allocation12 [shape = 'u8[8192]{0}', space=vmem, size = 0x2000, scoped, tag = 'output window, operand 0']
    %8 = vsyncpa [#allocation7], 0
    %s9 = scalar_lea.sflag [#allocation7], 1
    %10 = vsyncpa %s9, 0
    %11 = vsyncpa [#allocation10], 0
    %s12 = scalar_lea.sflag [#allocation10], 1
    %13 = vsyncpa %s12, 0
    %14 = vsyncpa [#allocation8], 0
    %s15 = scalar_lea.sflag [#allocation8], 1
    %16 = vsyncpa %s15, 0
    loop: start=0, step=1, limit=4
    $region2: #{tpu_custom_call.1} parent=1 // loop_pre_header
      _
    $region3: #{tpu_custom_call.1} parent=1 // loop_header
      %s18 = sphi 0, %s22
      %p19 = scmp.ge.s32.totalorder %s18, 4
      %s25 = sphi 0, %s44
      %s26 = sphi 0, %s40
      %s27 = sphi 0, %s36
      %s28 = sphi 0, %s25
      %s29 = sphi 0, %s26
      %s30 = sphi 0, %s27
      %s31 = sphi 0, %s28
      %s32 = sphi 0, %s29
      %s33 = sphi 0, %s30
      %s49 = sphi 0, %s51
      %s52 = sphi 0, %s49
      %s53 = sphi 0, %s52
      %s69 = sphi 0, %s53
      %s77 = sphi 0, %s79
      %s80 = sphi 0, %s77
      %s81 = sphi 0, %s80
      %s97 = sphi 0, %s81
      %s105 = sphi 0, %s107
      %s108 = sphi 0, %s105
      %s109 = sphi 0, %s108
      %s125 = sphi 0, %s109
      %s133 = sphi 0, %s135
      %s136 = sphi 0, %s133
      %s137 = sphi 0, %s136
      %s153 = sphi 0, %s137
    $region4: #{tpu_custom_call.1} parent=1 // loop_header_branch
      %21 = sbr.rel (%p19) target = $region8
    $region5: #{tpu_custom_call.1} parent=1 // loop_body
      %s23 = ssub.s32 %s18, 1
      %s24 = ssub.s32 %s18, 2
      %s34 = sadd.s32 1, %s27
      %p35 = scmp.ge.s32.totalorder %s34, 1
      %s36 = scalar_select %p35, 0, %s34
      %s37 = sadd.s32 1, %s26
      %s38 = scalar_select %p35, %s37, %s26
      %p39 = scmp.ge.s32.totalorder %s38, 1
      %s40 = scalar_select %p39, 0, %s38
      %s41 = sadd.s32 1, %s25
      %s42 = scalar_select %p39, %s41, %s25
      %p43 = scmp.ge.s32.totalorder %s42, 2
      %s44 = scalar_select %p43, 0, %s42
      %s45 = ssub.s32 %s25, %s44
      %s46 = ssub.s32 %s26, %s40
      %s47 = sor.u32 %s45, %s46
      %p48 = scmp.eq.s32.totalorder %s47, 0
      %s50 = sadd.s32 %s49, 1
      %s51 = scalar_select %p48, %s49, %s50
      %p54 = pneg %p48
      %p55 = scmp.eq.s32.totalorder %s18, 1
      %p56 = por %p54, %p55
      %p57 = scmp.ne.s32.totalorder %s49, %s52
      %p58 = scmp.eq.s32.totalorder %s18, 0
      %p59 = por %p57, %p58
      %p60 = scmp.ne.s32.totalorder %s49, %s52
      %p61 = scmp.eq.s32.totalorder %s23, 1
      %p62 = por %p60, %p61
      %p63 = scmp.ne.s32.totalorder %s52, %s53
      %p64 = scmp.eq.s32.totalorder %s23, 0
      %p65 = por %p63, %p64
      %p66 = scmp.ne.s32.totalorder %s52, %s53
      %p67 = scmp.eq.s32.totalorder %s24, 1
      %p68 = por %p66, %p67
      %p70 = scmp.ne.s32.totalorder %s53, %s69
      %p71 = scmp.eq.s32.totalorder %s24, 0
      %p72 = por %p70, %p71
      %s73 = ssub.s32 %s25, %s44
      %s74 = ssub.s32 %s27, %s36
      %s75 = sor.u32 %s73, %s74
      %p76 = scmp.eq.s32.totalorder %s75, 0
      %s78 = sadd.s32 %s77, 1
      %s79 = scalar_select %p76, %s77, %s78
      %p82 = pneg %p76
      %p83 = scmp.eq.s32.totalorder %s18, 1
      %p84 = por %p82, %p83
      %p85 = scmp.ne.s32.totalorder %s77, %s80
      %p86 = scmp.eq.s32.totalorder %s18, 0
      %p87 = por %p85, %p86
      %p88 = scmp.ne.s32.totalorder %s77, %s80
      %p89 = scmp.eq.s32.totalorder %s23, 1
      %p90 = por %p88, %p89
      %p91 = scmp.ne.s32.totalorder %s80, %s81
      %p92 = scmp.eq.s32.totalorder %s23, 0
      %p93 = por %p91, %p92
      %p94 = scmp.ne.s32.totalorder %s80, %s81
      %p95 = scmp.eq.s32.totalorder %s24, 1
      %p96 = por %p94, %p95
      %p98 = scmp.ne.s32.totalorder %s81, %s97
      %p99 = scmp.eq.s32.totalorder %s24, 0
      %p100 = por %p98, %p99
      %s101 = ssub.s32 %s25, %s44
      %s102 = ssub.s32 %s27, %s36
      %s103 = sor.u32 %s101, %s102
      %p104 = scmp.eq.s32.totalorder %s103, 0
      %s106 = sadd.s32 %s105, 1
      %s107 = scalar_select %p104, %s105, %s106
      %p110 = pneg %p104
      %p111 = scmp.eq.s32.totalorder %s18, 1
      %p112 = por %p110, %p111
      %p113 = scmp.ne.s32.totalorder %s105, %s108
      %p114 = scmp.eq.s32.totalorder %s18, 0
      %p115 = por %p113, %p114
      %p116 = scmp.ne.s32.totalorder %s105, %s108
      %p117 = scmp.eq.s32.totalorder %s23, 1
      %p118 = por %p116, %p117
      %p119 = scmp.ne.s32.totalorder %s108, %s109
      %p120 = scmp.eq.s32.totalorder %s23, 0
      %p121 = por %p119, %p120
      %p122 = scmp.ne.s32.totalorder %s108, %s109
      %p123 = scmp.eq.s32.totalorder %s24, 1
      %p124 = por %p122, %p123
      %p126 = scmp.ne.s32.totalorder %s109, %s125
      %p127 = scmp.eq.s32.totalorder %s24, 0
      %p128 = por %p126, %p127
      %s129 = ssub.s32 %s25, %s44
      %s130 = ssub.s32 %s26, %s40
      %s131 = sor.u32 %s129, %s130
      %p132 = scmp.eq.s32.totalorder %s131, 0
      %s134 = sadd.s32 %s133, 1
      %s135 = scalar_select %p132, %s133, %s134
      %p138 = pneg %p132
      %p139 = scmp.eq.s32.totalorder %s18, 1
      %p140 = por %p138, %p139
      %p141 = scmp.ne.s32.totalorder %s133, %s136
      %p142 = scmp.eq.s32.totalorder %s18, 0
      %p143 = por %p141, %p142
      %p144 = scmp.ne.s32.totalorder %s133, %s136
      %p145 = scmp.eq.s32.totalorder %s23, 1
      %p146 = por %p144, %p145
      %p147 = scmp.ne.s32.totalorder %s136, %s137
      %p148 = scmp.eq.s32.totalorder %s23, 0
      %p149 = por %p147, %p148
      %p150 = scmp.ne.s32.totalorder %s136, %s137
      %p151 = scmp.eq.s32.totalorder %s24, 1
      %p152 = por %p150, %p151
      %p154 = scmp.ne.s32.totalorder %s137, %s153
      %p155 = scmp.eq.s32.totalorder %s24, 0
      %p156 = por %p154, %p155
      %p157 = scmp.le.s32.totalorder 1, %s18
      %p158 = scmp.lt.s32.totalorder %s18, 3
      %p159 = pnand %p157, %p158
      %p160 = pneg %p159
      // Predicated region
      $region9: #{tpu_custom_call.1} parent=5 // pred_check
        _
      $region10: #{tpu_custom_call.1} parent=5 // pred_check_branch
        %162 = sbr.rel (%p159) target = $region12
      $region11: #{tpu_custom_call.1} parent=5 // pred_region
        %s163 = ssub.s32 %s18, 1
      $region12: #{tpu_custom_call.1} parent=5 // pred_fallthru
        _
      %p164 = scmp.lt.s32.totalorder %s18, 2
      // Predicated region
      $region13: #{tpu_custom_call.1} parent=5 // pred_check
        %p165 = pneg %p164
      $region14: #{tpu_custom_call.1} parent=5 // pred_check_branch
        %167 = sbr.rel (%p165) target = $region16
      $region15: #{tpu_custom_call.1} parent=5 // pred_region
        // Predicated region
        $region17: #{tpu_custom_call.1} parent=15 // pred_check
          %p168 = pneg %p59
        $region18: #{tpu_custom_call.1} parent=15 // pred_check_branch
          %170 = sbr.rel (%p168) target = $region20
        $region19: #{tpu_custom_call.1} parent=15 // pred_region
          %s171 = sand.u32 %s49, 1
          %s172 = scalar_lea.sflag [#allocation7], %s171
          %s173 = sand.u32 %s49, 1
          %s174 = smul.addr %s173, 8
          %s175 = scalar_lea.vmem [#allocation6], %s174
          %s177 = ssub.s32 128, 128
          %178 = vsyncadd %s172, %s177
          %s179 = sadd.s32 %s26, %s25
          %s180 = smul.addr %s179, 128
          %s181 = scalar_lea.hbm %s0, %s180
          %s183 = sshll.u32 %s175, 4
          %s184 = int_to_ptr.vmem [resolvable:$true] %s183
          %186 = dma.hbm_to_vmem [thread:$0]  %s181, 128, %s184, %s172
        $region20: #{tpu_custom_call.1} parent=15 // pred_fallthru
          _
        // Predicated region
        $region21: #{tpu_custom_call.1} parent=15 // pred_check
          %p187 = pneg %p87
        $region22: #{tpu_custom_call.1} parent=15 // pred_check_branch
          %189 = sbr.rel (%p187) target = $region24
        $region23: #{tpu_custom_call.1} parent=15 // pred_region
          %s190 = sand.u32 %s18, 1
          %s191 = scalar_lea.sflag [#allocation10], %s190
          %s192 = sand.u32 %s77, 1
          %s193 = smul.addr %s192, 8
          %s194 = scalar_lea.vmem [#allocation9], %s193
          %s196 = ssub.s32 128, 128
          %197 = vsyncadd %s191, %s196
          %s198 = sadd.s32 %s27, %s25
          %s199 = smul.addr %s198, 128
          %s200 = scalar_lea.hbm %s1, %s199
          %s202 = sshll.u32 %s194, 4
          %s203 = int_to_ptr.vmem [resolvable:$true] %s202
          %205 = dma.hbm_to_vmem [thread:$0]  %s200, 128, %s203, %s191
        $region24: #{tpu_custom_call.1} parent=15 // pred_fallthru
          _
        // Predicated region
        $region25: #{tpu_custom_call.1} parent=15 // pred_check
          %p206 = pneg %p115
        $region26: #{tpu_custom_call.1} parent=15 // pred_check_branch
          %208 = sbr.rel (%p206) target = $region28
        $region27: #{tpu_custom_call.1} parent=15 // pred_region
          %s209 = sand.u32 %s18, 1
          %s210 = scalar_lea.sflag [#allocation10], %s209
          %s211 = sand.u32 %s105, 1
          %s212 = smul.addr %s211, 8
          %s213 = scalar_lea.vmem [#allocation11], %s212
          %s215 = ssub.s32 128, 128
          %216 = vsyncadd %s210, %s215
          %s217 = sadd.s32 %s27, %s25
          %s218 = smul.addr %s217, 128
          %s219 = scalar_lea.hbm %s2, %s218
          %s221 = sshll.u32 %s213, 4
          %s222 = int_to_ptr.vmem [resolvable:$true] %s221
          %224 = dma.hbm_to_vmem [thread:$0]  %s219, 128, %s222, %s210
        $region28: #{tpu_custom_call.1} parent=15 // pred_fallthru
          _
      $region16: #{tpu_custom_call.1} parent=5 // pred_fallthru
        _
      %p225 = scmp.le.s32.totalorder 1, %s18
      %p226 = scmp.lt.s32.totalorder %s18, 3
      %p227 = pnand %p225, %p226
      %p228 = pneg %p227
      // Predicated region
      $region29: #{tpu_custom_call.1} parent=5 // pred_check
        _
      $region30: #{tpu_custom_call.1} parent=5 // pred_check_branch
        %230 = sbr.rel (%p227) target = $region32
      $region31: #{tpu_custom_call.1} parent=5 // pred_region
        %s231 = ssub.s32 %s18, 1
        %s232 = sand.u32 %s52, 1
        %s233 = scalar_lea.sflag [#allocation7], %s232
        %s234 = sand.u32 %s52, 1
        %s235 = smul.addr %s234, 8
        %s236 = scalar_lea.vmem [#allocation6], %s235
        // Predicated region
        $region33: #{tpu_custom_call.1} parent=31 // pred_check
          %p237 = pneg %p65
        $region34: #{tpu_custom_call.1} parent=31 // pred_check_branch
          %239 = sbr.rel (%p237) target = $region36
        $region35: #{tpu_custom_call.1} parent=31 // pred_region
          %240 = dma.done %s233, 128
        $region36: #{tpu_custom_call.1} parent=31 // pred_fallthru
          _
        %s241 = sand.u32 %s23, 1
        %s242 = scalar_lea.sflag [#allocation10], %s241
        %s243 = sand.u32 %s80, 1
        %s244 = smul.addr %s243, 8
        %s245 = scalar_lea.vmem [#allocation9], %s244
        // Predicated region
        $region37: #{tpu_custom_call.1} parent=31 // pred_check
          %p246 = pneg %p93
        $region38: #{tpu_custom_call.1} parent=31 // pred_check_branch
          %248 = sbr.rel (%p246) target = $region40
        $region39: #{tpu_custom_call.1} parent=31 // pred_region
          %249 = dma.done %s242, 128
        $region40: #{tpu_custom_call.1} parent=31 // pred_fallthru
          _
        %s250 = sand.u32 %s23, 1
        %s251 = scalar_lea.sflag [#allocation10], %s250
        %s252 = sand.u32 %s108, 1
        %s253 = smul.addr %s252, 8
        %s254 = scalar_lea.vmem [#allocation11], %s253
        // Predicated region
        $region41: #{tpu_custom_call.1} parent=31 // pred_check
          %p255 = pneg %p121
        $region42: #{tpu_custom_call.1} parent=31 // pred_check_branch
          %257 = sbr.rel (%p255) target = $region44
        $region43: #{tpu_custom_call.1} parent=31 // pred_region
          %258 = dma.done %s251, 128
        $region44: #{tpu_custom_call.1} parent=31 // pred_fallthru
          _
        %s259 = sand.u32 %s52, 1
        %s260 = scalar_lea.sflag [#allocation7], %s259
        %s261 = sand.u32 %s52, 1
        %s262 = smul.addr %s261, 8
        %s263 = scalar_lea.vmem [#allocation6], %s262
        %p264 = pneg %p65
        %p265 = pneg %p62
        %s266 = sand.u32 %s23, 1
        %s267 = scalar_lea.sflag [#allocation10], %s266
        %s268 = sand.u32 %s80, 1
        %s269 = smul.addr %s268, 8
        %s270 = scalar_lea.vmem [#allocation9], %s269
        %p271 = pneg %p93
        %p272 = pneg %p90
        %s273 = sand.u32 %s23, 1
        %s274 = scalar_lea.sflag [#allocation10], %s273
        %s275 = sand.u32 %s108, 1
        %s276 = smul.addr %s275, 8
        %s277 = scalar_lea.vmem [#allocation11], %s276
        %p278 = pneg %p121
        %p279 = pneg %p118
        %p280 = pneg %p149
        %p281 = pneg %p146
        %s282 = sand.u32 %s136, 1
        %s283 = scalar_lea.sflag [#allocation8], %s282
        %s284 = sand.u32 %s136, 1
        %s285 = smul.addr %s284, 8
        %s286 = scalar_lea.vmem [#allocation12], %s285
        %p287 = scmp.eq.s32.totalorder %s30, 0
        // Predicated region
        $region45: #{tpu_custom_call.1} parent=31 // pred_check
          %p288 = pneg %p287
        $region46: #{tpu_custom_call.1} parent=31 // pred_check_branch
          %290 = sbr.rel (%p288) target = $region48
        $region47: #{tpu_custom_call.1} parent=31 // pred_region
          %v291 = vld [vmem:[%s236] sm:$0xff]
          %v292 = vmul.f32 %v291, 0.17677669
          %vm293 = vcmask 261120
          %294 = vst.msk [vmem:[#allocation2] sm:$0xff] %vm293, %v292
          %vm295 = vcmask 7168
          %296 = vst.msk [vmem:[#allocation3] sm:$0xff] %vm295, -inf
          %297 = vst.msk [vmem:[#allocation4] sm:$0xff] %vm295, 0.0
          %298 = vst.msk [vmem:[#allocation5] sm:$0xff] %vm293, 0.0
        $region48: #{tpu_custom_call.1} parent=31 // pred_fallthru
          _
        %v299 = vld [vmem:[#allocation2] sm:$0xff]
        %v300 = vld [vmem:[%s245] sm:$0xff]
        %v301 = vld [vmem:[%s254] sm:$0xff]
        %vm302 = vcmask 261120
        %v304 = vsel %vm302, %v299, 0
        %v307 = vsel %vm302, %v300, 0
        %309 = vmatprep.subr.mxu0 0.0
        %310 = vmatpush1.xpose.msra.mxu0 %v307
        %311 = vmatprep.subr.mxu0 0.0
        %312 = vmatpush1.xpose.msra.mxu0 0.0
        %313 = vmatprep.subr.mxu0 0.0
        %314 = vmatpush1.xpose.msra.mxu0 0.0
        %315 = vmatprep.subr.mxu0 0.0
        %316 = vmatpush1.xpose.msra.mxu0 0.0
        %317 = vmatprep.subr.mxu0 0.0
        %318 = vmatpush1.xpose.msra.mxu0 0.0
        %319 = vmatprep.subr.mxu0 0.0
        %320 = vmatpush1.xpose.msra.mxu0 0.0
        %321 = vmatprep.subr.mxu0 0.0
        %322 = vmatpush1.xpose.msra.mxu0 0.0
        %323 = vmatprep.subr.mxu0 0.0
        %324 = vmatpush1.xpose.msra.mxu0 0.0
        %325 = vmatprep.subr.mxu0 0.0
        %326 = vmatpush1.xpose.msra.mxu0 0.0
        %327 = vmatprep.subr.mxu0 0.0
        %328 = vmatpush1.xpose.msra.mxu0 0.0
        %329 = vmatprep.subr.mxu0 0.0
        %330 = vmatpush1.xpose.msra.mxu0 0.0
        %331 = vmatprep.subr.mxu0 0.0
        %332 = vmatpush1.xpose.msra.mxu0 0.0
        %333 = vmatprep.subr.mxu0 0.0
        %334 = vmatpush1.xpose.msra.mxu0 0.0
        %335 = vmatprep.subr.mxu0 0.0
        %336 = vmatpush1.xpose.msra.mxu0 0.0
        %337 = vmatprep.subr.mxu0 0.0
        %338 = vmatpush1.xpose.msra.mxu0 0.0
        %339 = vmatprep.subr.mxu0 0.0
        %340 = vmatpush1.xpose.msra.mxu0 0.0
        %341 = vmatprep.subr.mxu0 0.0
        %342 = vmatpush1.xpose.msra.mxu0 0.0
        %343 = vmatprep.subr.mxu0 0.0
        %344 = vmatpush1.xpose.msra.mxu0 0.0
        %345 = vmatprep.subr.mxu0 0.0
        %346 = vmatpush1.xpose.msra.mxu0 0.0
        %347 = vmatprep.subr.mxu0 0.0
        %348 = vmatpush1.xpose.msra.mxu0 0.0
        %349 = vmatprep.subr.mxu0 0.0
        %350 = vmatpush1.xpose.msra.mxu0 0.0
        %351 = vmatprep.subr.mxu0 0.0
        %352 = vmatpush1.xpose.msra.mxu0 0.0
        %353 = vmatprep.subr.mxu0 0.0
        %354 = vmatpush1.xpose.msra.mxu0 0.0
        %355 = vmatprep.subr.mxu0 0.0
        %356 = vmatpush1.xpose.msra.mxu0 0.0
        %357 = vmatprep.subr.mxu0 0.0
        %358 = vmatpush1.xpose.msra.mxu0 0.0
        %359 = vmatprep.subr.mxu0 0.0
        %360 = vmatpush1.xpose.msra.mxu0 0.0
        %361 = vmatprep.subr.mxu0 0.0
        %362 = vmatpush1.xpose.msra.mxu0 0.0
        %363 = vmatprep.subr.mxu0 0.0
        %364 = vmatpush1.xpose.msra.mxu0 0.0
        %365 = vmatprep.subr.mxu0 0.0
        %366 = vmatpush1.xpose.msra.mxu0 0.0
        %367 = vmatprep.subr.mxu0 0.0
        %368 = vmatpush1.xpose.msra.mxu0 0.0
        %369 = vmatprep.subr.mxu0 0.0
        %370 = vmatpush1.xpose.msra.mxu0 0.0
        %371 = vmatprep.subr.mxu0 0.0
        %372 = vmatpush1.xpose.msra.mxu0 0.0
        %373 = vmatprep.mubr.f32.mxu0 0.0
        %374 = vmatmul.mubr.f32.gmra.mrb[0].mxu0 %v304
        %v375 = vpop.f32.mrb[0].mxu0
        %v376 = vadd.f32 0.0, %v375
        %v377 = vpop.f32.mrb[0].mxu0
        %378 = vdwg.mxu0
        %v379 = vld [vmem:[#allocation3] sm:$0xff]
        %vm380 = vcmask 64512
        %v381 = vsel %vm380, %v376, -inf
        %382 = vmax.xlane.f32.xlu0 %v381
        %v383 = vpop.xlane.xlu0 %382
        %v384 = vmax.f32 %v379, %v383
        %v385 = vsub.f32 %v379, %v384
        %v386 = vmul.f32 %v385, 1.442695
        %v387 = vpow.pop %v386
        %389 = vset.pattern.permute.xlu0 0
        %390 = vperm.xlu0 %389, %v384
        %v391 = vpop.permute.xlu0 %390
        %v393 = vsub.f32 %v376, %v391
        %v394 = vmul.f32 %v393, 1.442695
        %v395 = vpow.pop %v394
        %v396 = vld [vmem:[#allocation4] sm:$0xff]
        %v397 = vmul.f32 %v387, %v396
        %v398 = vsel %vm380, %v395, 0.0
        %399 = vadd.xlane.f32.xlu0 %v398
        %v400 = vpop.xlane.xlu0 %399
        %v401 = vadd.f32 %v397, %v400
        %vm402 = vcmask 7168
        %403 = vst.msk [vmem:[#allocation4] sm:$0xff] %vm402, %v401
        %v404 = vld [vmem:[#allocation5] sm:$0xff]
        %406 = vset.pattern.permute.xlu0 0
        %407 = vperm.xlu0 %406, %v387
        %v408 = vpop.permute.xlu0 %407
        %v410 = vmul.f32 %v408, %v404
        %v412 = vsel %vm380, %v395, 0
        %414 = vmatprep.subr.mxu0 0.0
        %415 = vmatpush1.msra.mxu0 %v301
        %416 = vmatprep.subr.mxu0 0.0
        %417 = vmatpush1.msra.mxu0 0.0
        %418 = vmatprep.subr.mxu0 0.0
        %419 = vmatpush1.msra.mxu0 0.0
        %420 = vmatprep.subr.mxu0 0.0
        %421 = vmatpush1.msra.mxu0 0.0
        %422 = vmatprep.subr.mxu0 0.0
        %423 = vmatpush1.msra.mxu0 0.0
        %424 = vmatprep.subr.mxu0 0.0
        %425 = vmatpush1.msra.mxu0 0.0
        %426 = vmatprep.subr.mxu0 0.0
        %427 = vmatpush1.msra.mxu0 0.0
        %428 = vmatprep.subr.mxu0 0.0
        %429 = vmatpush1.msra.mxu0 0.0
        %430 = vmatprep.subr.mxu0 0.0
        %431 = vmatpush1.msra.mxu0 0.0
        %432 = vmatprep.subr.mxu0 0.0
        %433 = vmatpush1.msra.mxu0 0.0
        %434 = vmatprep.subr.mxu0 0.0
        %435 = vmatpush1.msra.mxu0 0.0
        %436 = vmatprep.subr.mxu0 0.0
        %437 = vmatpush1.msra.mxu0 0.0
        %438 = vmatprep.subr.mxu0 0.0
        %439 = vmatpush1.msra.mxu0 0.0
        %440 = vmatprep.subr.mxu0 0.0
        %441 = vmatpush1.msra.mxu0 0.0
        %442 = vmatprep.subr.mxu0 0.0
        %443 = vmatpush1.msra.mxu0 0.0
        %444 = vmatprep.subr.mxu0 0.0
        %445 = vmatpush1.msra.mxu0 0.0
        %446 = vmatprep.subr.mxu0 0.0
        %447 = vmatpush1.msra.mxu0 0.0
        %448 = vmatprep.subr.mxu0 0.0
        %449 = vmatpush1.msra.mxu0 0.0
        %450 = vmatprep.subr.mxu0 0.0
        %451 = vmatpush1.msra.mxu0 0.0
        %452 = vmatprep.subr.mxu0 0.0
        %453 = vmatpush1.msra.mxu0 0.0
        %454 = vmatprep.subr.mxu0 0.0
        %455 = vmatpush1.msra.mxu0 0.0
        %456 = vmatprep.subr.mxu0 0.0
        %457 = vmatpush1.msra.mxu0 0.0
        %458 = vmatprep.subr.mxu0 0.0
        %459 = vmatpush1.msra.mxu0 0.0
        %460 = vmatprep.subr.mxu0 0.0
        %461 = vmatpush1.msra.mxu0 0.0
        %462 = vmatprep.subr.mxu0 0.0
        %463 = vmatpush1.msra.mxu0 0.0
        %464 = vmatprep.subr.mxu0 0.0
        %465 = vmatpush1.msra.mxu0 0.0
        %466 = vmatprep.subr.mxu0 0.0
        %467 = vmatpush1.msra.mxu0 0.0
        %468 = vmatprep.subr.mxu0 0.0
        %469 = vmatpush1.msra.mxu0 0.0
        %470 = vmatprep.subr.mxu0 0.0
        %471 = vmatpush1.msra.mxu0 0.0
        %472 = vmatprep.subr.mxu0 0.0
        %473 = vmatpush1.msra.mxu0 0.0
        %474 = vmatprep.subr.mxu0 0.0
        %475 = vmatpush1.msra.mxu0 0.0
        %476 = vmatprep.subr.mxu0 0.0
        %477 = vmatpush1.msra.mxu0 0.0
        %478 = vmatprep.mubr.f32.mxu0 0.0
        %479 = vmatmul.mubr.f32.gmra.mrb[0].mxu0 %v412
        %v480 = vpop.f32.mrb[0].mxu0
        %v481 = vadd.f32 0.0, %v480
        %v482 = vpop.f32.mrb[0].mxu0
        %483 = vdwg.mxu0
        %v484 = vadd.f32 %v410, %v481
        %485 = vst.msk [vmem:[#allocation5] sm:$0xff] %vm302, %v484
        %486 = vst.msk [vmem:[#allocation3] sm:$0xff] %vm402, %v384
        // Predicated region
        $region49: #{tpu_custom_call.1} parent=31 // pred_check
          %p487 = pneg %p287
        $region50: #{tpu_custom_call.1} parent=31 // pred_check_branch
          %489 = sbr.rel (%p487) target = $region52
        $region51: #{tpu_custom_call.1} parent=31 // pred_region
          %v490 = vld [vmem:[#allocation4] sm:$0xff]
          %v491 = vrcp.pop %v490
          %v492 = vmul.f32 %v490, %v491
          %v493 = vsub.f32 2.0, %v492
          %v494 = vmul.f32 %v491, %v493
          %v495 = vld [vmem:[#allocation5] sm:$0xff]
          %497 = vset.pattern.permute.xlu0 0
          %498 = vperm.xlu0 %497, %v494
          %v499 = vpop.permute.xlu0 %498
          %v501 = vmul.f32 %v495, %v499
          %502 = vst.msk [vmem:[%s286] sm:$0xff] %vm302, %v501
        $region52: #{tpu_custom_call.1} parent=31 // pred_fallthru
          _
        %s503 = sand.u32 %s136, 1
        %s504 = scalar_lea.sflag [#allocation8], %s503
        %s505 = sand.u32 %s136, 1
        %s506 = smul.addr %s505, 8
        %s507 = scalar_lea.vmem [#allocation12], %s506
        // Predicated region
        $region53: #{tpu_custom_call.1} parent=31 // pred_check
          %p508 = pneg %p146
        $region54: #{tpu_custom_call.1} parent=31 // pred_check_branch
          %510 = sbr.rel (%p508) target = $region56
        $region55: #{tpu_custom_call.1} parent=31 // pred_region
          %s512 = ssub.s32 128, 128
          %513 = vsyncadd %s504, %s512
          %s514 = sadd.s32 %s29, %s28
          %s515 = smul.addr %s514, 128
          %s516 = scalar_lea.hbm %s3, %s515
          %s518 = sshll.u32 %s507, 4
          %s519 = int_to_ptr.vmem [resolvable:$true] %s518
          %521 = dma.vmem_to_hbm [thread:$0]  %s519, 128, %s516, %s504
        $region56: #{tpu_custom_call.1} parent=31 // pred_fallthru
          _
      $region32: #{tpu_custom_call.1} parent=5 // pred_fallthru
        _
      %p522 = scmp.le.s32.totalorder 2, %s18
      // Predicated region
      $region57: #{tpu_custom_call.1} parent=5 // pred_check
        %p523 = pneg %p522
      $region58: #{tpu_custom_call.1} parent=5 // pred_check_branch
        %525 = sbr.rel (%p523) target = $region60
      $region59: #{tpu_custom_call.1} parent=5 // pred_region
        %s526 = ssub.s32 %s18, 2
        // Predicated region
        $region61: #{tpu_custom_call.1} parent=59 // pred_check
          %p527 = pneg %p152
        $region62: #{tpu_custom_call.1} parent=59 // pred_check_branch
          %529 = sbr.rel (%p527) target = $region64
        $region63: #{tpu_custom_call.1} parent=59 // pred_region
          %s530 = sand.u32 %s137, 1
          %s531 = scalar_lea.sflag [#allocation8], %s530
          %s532 = sand.u32 %s137, 1
          %s533 = smul.addr %s532, 8
          %s534 = scalar_lea.vmem [#allocation12], %s533
          %535 = dma.done %s531, 128
        $region64: #{tpu_custom_call.1} parent=59 // pred_fallthru
          _
      $region60: #{tpu_custom_call.1} parent=5 // pred_fallthru
        _
    $region6: #{tpu_custom_call.1} parent=1 // loop_footer
      %s22 = sadd.s32 1, %s18
    $region7: #{tpu_custom_call.1} parent=1 // loop_footer_branch
      %17 = sbr.rel target = $region3
    $region8: #{tpu_custom_call.1} parent=1 // loop_exit
      _
    %536 = vsyncpa [#allocation7], 1
    %s537 = scalar_lea.sflag [#allocation7], 1
    %538 = vsyncpa %s537, 1
    %539 = vsyncpa [#allocation10], 1
    %s540 = scalar_lea.sflag [#allocation10], 1
    %541 = vsyncpa %s540, 1
    %542 = vsyncpa [#allocation8], 1
    %s543 = scalar_lea.sflag [#allocation8], 1
    %544 = vsyncpa %s543, 1

</llo_original>
